<compile_context>
chip_gen: v6e
topology: v6e:2x2x1
jax: 0.10.0
libtpu: 0.0.40
codegen_flags: <defaults>
</compile_context>

<pallas_src>
import jax
import jax.numpy as jnp
from jax.experimental import pallas as pl
from jax.experimental.pallas import tpu as pltpu

LANES = 128
SUBLANES = 8
EPS = 1e-8


def _cdiv(a, b):
    return -(-a // b)


def _round_up(a, b):
    return _cdiv(a, b) * b


def _masked_bce_kernel(pred_ref, target_ref, mask_ref, loss_part_ref, mask_part_ref):
    i = pl.program_id(1)  # inner (reduction) grid axis

    @pl.when(i == 0)
    def _():
        loss_part_ref[...] = jnp.zeros_like(loss_part_ref)
        mask_part_ref[...] = jnp.zeros_like(mask_part_ref)

    p = pred_ref[...].astype(jnp.float32)
    t = target_ref[...].astype(jnp.float32)
    m = mask_ref[...].astype(jnp.float32)

    # -(t * log(p + eps) + (1 - t) * log(1 - p + eps))
    # Two logs kept on purpose: valid for soft (non-binary) targets.
    loss = -(t * jnp.log(p + EPS) + (1.0 - t) * jnp.log(1.0 - p + EPS))
    masked = m * loss

    # VPU-only partial accumulation: reduce over the leading (vreg) axis so the
    # tile folds into one (8,128) accumulator with elementwise adds; the
    # cross-lane/sublane reduce to a scalar happens once, in the JAX glue.
    loss_part_ref[...] += masked.reshape(-1, SUBLANES, LANES).sum(axis=0)
    mask_part_ref[...] += m.reshape(-1, SUBLANES, LANES).sum(axis=0)


def masked_bce_loss(pred, target, mask, *, tile_rows=2048, parallel_blocks=2):
    assert pred.shape == target.shape == mask.shape
    assert tile_rows % SUBLANES == 0

    total = pred.size
    rows = _cdiv(total, LANES)
    block_rows = min(tile_rows, _round_up(rows, SUBLANES))
    num_row_blocks = _cdiv(rows, block_rows)
    outer = max(1, min(parallel_blocks, num_row_blocks))   # parallel axis (v7x: 2 TCs)
    inner = _cdiv(num_row_blocks, outer)                   # reduction axis
    padded_rows = outer * inner * block_rows
    pad = padded_rows * LANES - total

    def prep(x):
        # Keep native dtype (cast to f32 inside the kernel); ravel/reshape are
        # layout-only.  Zero padding only happens for misaligned sizes and is
        # harmless: mask pad == 0 so padded elements contribute nothing.
        # TODO(synk): mask the ragged tail in-kernel (scalar-prefetched total +
        # broadcasted_iota) to drop this pad copy for misaligned sizes.
        x = jnp.ravel(x)
        if pad:
            x = jnp.pad(x, (0, pad))
        return x.reshape(padded_rows, LANES)

    p2, t2, m2 = prep(pred), prep(target), prep(mask)

    in_spec = pl.BlockSpec((block_rows, LANES), lambda o, i: (o * inner + i, 0))
    out_spec = pl.BlockSpec((SUBLANES, LANES), lambda o, i: (o, 0))

    loss_part, mask_part = pl.pallas_call(
        _masked_bce_kernel,
        out_shape=(
            jax.ShapeDtypeStruct((outer * SUBLANES, LANES), jnp.float32),
            jax.ShapeDtypeStruct((outer * SUBLANES, LANES), jnp.float32),
        ),
        grid_spec=pltpu.PrefetchScalarGridSpec(
            num_scalar_prefetch=0,
            grid=(outer, inner),
            in_specs=[in_spec, in_spec, in_spec],
            out_specs=[out_spec, out_spec],
        ),
        compiler_params=pltpu.CompilerParams(
            dimension_semantics=("parallel", "arbitrary"),
            vmem_limit_bytes=32 * 1024 * 1024,
        ),
    )(p2, t2, m2)

    # Tiny final reduce + divide in plain JAX (same NaN-on-empty-mask semantics
    # as the PyTorch reference).
    return jnp.sum(loss_part) / jnp.sum(mask_part)


def _reference(pred, target, mask):
    loss_per_pixel = -(target * jnp.log(pred + EPS)
                       + (1.0 - target) * jnp.log(1.0 - pred + EPS))
    masked = mask * loss_per_pixel
    return jnp.sum(masked) / jnp.sum(mask)


if __name__ == "__main__":
    key = jax.random.PRNGKey(0)

    def make_inputs(shape, k):
        k1, k2, k3 = jax.random.split(k, 3)
        pred = jax.random.uniform(k1, shape, jnp.float32, 1e-3, 1.0 - 1e-3)
        target = (jax.random.uniform(k2, shape) > 0.5).astype(jnp.float32)
        mask = (jax.random.uniform(k3, shape) > 0.3).astype(jnp.float32)
        return pred, target, mask

    cases = [
        ((2, 4, 16, 16), dict()),                                # aligned, single block
        ((2, 4, 16, 16), dict(tile_rows=8, parallel_blocks=2)),  # exercises parallel axis
        ((2, 4, 16, 16), dict(tile_rows=8, parallel_blocks=1)),  # exercises inner accumulation
        ((2, 3, 15, 17), dict()),                                # ragged tail (pad path)
    ]

    keys = jax.random.split(key, len(cases))
    for (shape, kwargs), k in zip(cases, keys):
        pred, target, mask = make_inputs(shape, k)
        out = jax.block_until_ready(masked_bce_loss(pred, target, mask, **kwargs))
        ref = _reference(pred, target, mask)
        assert jnp.allclose(out, ref, rtol=1e-5, atol=1e-5), (shape, kwargs, out, ref)

    print("KERNEL_OK")
</pallas_src>

<mosaic_0001>
module attributes {stable_mosaic.version = 11 : i64} {
  func.func @_masked_bce_kernel(%arg0: i32, %arg1: i32, %arg2: memref<16x128xf32, #tpu.memory_space<vmem>>, %arg3: memref<16x128xf32, #tpu.memory_space<vmem>>, %arg4: memref<16x128xf32, #tpu.memory_space<vmem>>, %arg5: memref<8x128xf32, #tpu.memory_space<vmem>>, %arg6: memref<8x128xf32, #tpu.memory_space<vmem>>) attributes {dimension_semantics = [#tpu.dimension_semantics<parallel>, #tpu.dimension_semantics<arbitrary>], iteration_bounds = array<i64: 1, 1>, scalar_prefetch = 0 : i64, scratch_operands = 0 : i64, tpu.core_type = #tpu.core_type<tc>, window_params = [{transform_indices = @transform_0, window_bounds = array<i64: 16, 128>}, {transform_indices = @transform_1, window_bounds = array<i64: 16, 128>}, {transform_indices = @transform_2, window_bounds = array<i64: 16, 128>}, {transform_indices = @transform_3, window_bounds = array<i64: 8, 128>}, {transform_indices = @transform_4, window_bounds = array<i64: 8, 128>}]} {
    %c0_i32 = arith.constant 0 : i32
    %0 = arith.cmpi eq, %arg1, %c0_i32 : i32
    %1 = arith.extui %0 : i1 to i32
    %c0_i32_0 = arith.constant 0 : i32
    %2 = arith.cmpi ne, %1, %c0_i32_0 : i32
    scf.if %2 {
      %cst_20 = arith.constant 0.000000e+00 : f32
      %32 = vector.broadcast %cst_20 : f32 to vector<8x128xf32>
      %c0_21 = arith.constant 0 : index
      %c0_22 = arith.constant 0 : index
      %33 = vector.load %arg5[%c0_21, %c0_22] : memref<8x128xf32, #tpu.memory_space<vmem>>, vector<8x128xf32>
      tpu.vector_store %arg5[%c0_21, %c0_22], %32 {strides = array<i32>} : memref<8x128xf32, #tpu.memory_space<vmem>>, vector<8x128xf32>,
      %cst_23 = arith.constant 0.000000e+00 : f32
      %34 = vector.broadcast %cst_23 : f32 to vector<8x128xf32>
      %c0_24 = arith.constant 0 : index
      %c0_25 = arith.constant 0 : index
      %35 = vector.load %arg6[%c0_24, %c0_25] : memref<8x128xf32, #tpu.memory_space<vmem>>, vector<8x128xf32>
      tpu.vector_store %arg6[%c0_24, %c0_25], %34 {strides = array<i32>} : memref<8x128xf32, #tpu.memory_space<vmem>>, vector<8x128xf32>,
    } else {
    }
    %c0 = arith.constant 0 : index
    %c0_1 = arith.constant 0 : index
    %3 = vector.load %arg2[%c0, %c0_1] : memref<16x128xf32, #tpu.memory_space<vmem>>, vector<16x128xf32>
    %c0_2 = arith.constant 0 : index
    %c0_3 = arith.constant 0 : index
    %4 = vector.load %arg3[%c0_2, %c0_3] : memref<16x128xf32, #tpu.memory_space<vmem>>, vector<16x128xf32>
    %c0_4 = arith.constant 0 : index
    %c0_5 = arith.constant 0 : index
    %5 = vector.load %arg4[%c0_4, %c0_5] : memref<16x128xf32, #tpu.memory_space<vmem>>, vector<16x128xf32>
    %cst = arith.constant 9.99999993E-9 : f32
    %6 = vector.broadcast %cst : f32 to vector<16x128xf32>
    %7 = arith.addf %3, %6 : vector<16x128xf32>
    %8 = math.log %7 : vector<16x128xf32>
    %9 = arith.mulf %4, %8 : vector<16x128xf32>
    %cst_6 = arith.constant 1.000000e+00 : f32
    %10 = vector.broadcast %cst_6 : f32 to vector<16x128xf32>
    %11 = arith.subf %10, %4 : vector<16x128xf32>
    %cst_7 = arith.constant 1.000000e+00 : f32
    %12 = vector.broadcast %cst_7 : f32 to vector<16x128xf32>
    %13 = arith.subf %12, %3 : vector<16x128xf32>
    %cst_8 = arith.constant 9.99999993E-9 : f32
    %14 = vector.broadcast %cst_8 : f32 to vector<16x128xf32>
    %15 = arith.addf %13, %14 : vector<16x128xf32>
    %16 = math.log %15 : vector<16x128xf32>
    %17 = arith.mulf %11, %16 : vector<16x128xf32>
    %18 = arith.addf %9, %17 : vector<16x128xf32>
    %cst_9 = arith.constant 0.000000e+00 : f32
    %19 = vector.broadcast %cst_9 : f32 to vector<16x128xf32>
    %20 = arith.subf %19, %18 : vector<16x128xf32>
    %21 = arith.mulf %5, %20 : vector<16x128xf32>
    %c0_10 = arith.constant 0 : index
    %c0_11 = arith.constant 0 : index
    %22 = vector.load %arg5[%c0_10, %c0_11] : memref<8x128xf32, #tpu.memory_space<vmem>>, vector<8x128xf32>
    %23 = vector.shape_cast %21 : vector<16x128xf32> to vector<2x8x128xf32>
    %cst_12 = arith.constant dense<0.000000e+00> : vector<8x128xf32>
    %24 = vector.multi_reduction <add>, %23, %cst_12 [0] : vector<2x8x128xf32> to vector<8x128xf32>
    %25 = arith.addf %22, %24 : vector<8x128xf32>
    %c0_13 = arith.constant 0 : index
    %c0_14 = arith.constant 0 : index
    %26 = vector.load %arg5[%c0_13, %c0_14] : memref<8x128xf32, #tpu.memory_space<vmem>>, vector<8x128xf32>
    tpu.vector_store %arg5[%c0_13, %c0_14], %25 {strides = array<i32>} : memref<8x128xf32, #tpu.memory_space<vmem>>, vector<8x128xf32>,
    %c0_15 = arith.constant 0 : index
    %c0_16 = arith.constant 0 : index
    %27 = vector.load %arg6[%c0_15, %c0_16] : memref<8x128xf32, #tpu.memory_space<vmem>>, vector<8x128xf32>
    %28 = vector.shape_cast %5 : vector<16x128xf32> to vector<2x8x128xf32>
    %cst_17 = arith.constant dense<0.000000e+00> : vector<8x128xf32>
    %29 = vector.multi_reduction <add>, %28, %cst_17 [0] : vector<2x8x128xf32> to vector<8x128xf32>
    %30 = arith.addf %27, %29 : vector<8x128xf32>
    %c0_18 = arith.constant 0 : index
    %c0_19 = arith.constant 0 : index
    %31 = vector.load %arg6[%c0_18, %c0_19] : memref<8x128xf32, #tpu.memory_space<vmem>>, vector<8x128xf32>
    tpu.vector_store %arg6[%c0_18, %c0_19], %30 {strides = array<i32>} : memref<8x128xf32, #tpu.memory_space<vmem>>, vector<8x128xf32>,
    return
  }
  func.func @transform_0(%arg0: i32, %arg1: i32) -> (i32, i32) {
    %c1_i32 = arith.constant 1 : i32
    %0 = arith.muli %arg0, %c1_i32 : i32
    %1 = arith.addi %0, %arg1 : i32
    %c0_i32 = arith.constant 0 : i32
    %c0_i32_0 = arith.constant 0 : i32
    return %1, %c0_i32 : i32, i32
  }
  func.func @transform_1(%arg0: i32, %arg1: i32) -> (i32, i32) {
    %c1_i32 = arith.constant 1 : i32
    %0 = arith.muli %arg0, %c1_i32 : i32
    %1 = arith.addi %0, %arg1 : i32
    %c0_i32 = arith.constant 0 : i32
    %c0_i32_0 = arith.constant 0 : i32
    return %1, %c0_i32 : i32, i32
  }
  func.func @transform_2(%arg0: i32, %arg1: i32) -> (i32, i32) {
    %c1_i32 = arith.constant 1 : i32
    %0 = arith.muli %arg0, %c1_i32 : i32
    %1 = arith.addi %0, %arg1 : i32
    %c0_i32 = arith.constant 0 : i32
    %c0_i32_0 = arith.constant 0 : i32
    return %1, %c0_i32 : i32, i32
  }
  func.func @transform_3(%arg0: i32, %arg1: i32) -> (i32, i32) {
    %c0_i32 = arith.constant 0 : i32
    %c0_i32_0 = arith.constant 0 : i32
    return %arg0, %c0_i32 : i32, i32
  }
  func.func @transform_4(%arg0: i32, %arg1: i32) -> (i32, i32) {
    %c0_i32 = arith.constant 0 : i32
    %c0_i32_0 = arith.constant 0 : i32
    return %arg0, %c0_i32 : i32, i32
  }
}

</mosaic_0001>

<llo_original>
// kernel: tpu_custom_call.1
$region0: #{tpu_custom_call.1}
  #allocation0 [shape = 'u32[]', space=smem, size = 0x4, offset = 0x4, fixed_abs, tag = 'smem constant byte address 0x4 - core index']
  #allocation1 [shape = 'u32[144,128]{1,0:T(1,128)}', space=vmem, size = 0x12000, scoped, tag = 'internal scratch']
  %s0 = inlined_call_operand.hbm [shape: f32[16,128], index: 0, kind: input, shape index: {}]
  %s1 = inlined_call_operand.hbm [shape: f32[16,128], index: 1, kind: input, shape index: {}]
  %s2 = inlined_call_operand.hbm [shape: f32[16,128], index: 2, kind: input, shape index: {}]
  %s3 = inlined_call_operand.hbm [shape: f32[8,128], index: 3, kind: output, shape index: {0}]
  %s4 = inlined_call_operand.hbm [shape: f32[8,128], index: 4, kind: output, shape index: {1}]
  %5 = xla_tuple %s3, %s4
  %s6 = sld [smem:[#allocation0]]
  $region46: #{tpu_custom_call.1} parent=0
    _
  %s8 = ssub.s32 1, %s6
  %s9 = scalar_select 0, %s8, %s6
  $region1: #{tpu_custom_call.1} parent=0
    #allocation2 [shape = 'u8[8192]{0}', space=vmem, size = 0x2000, scoped, tag = 'input window, operand 0, single buffered']
    #allocation3 [shape = 's32[1]{0}', space=sflag, size = 0x4, scoped, tag = 'scoped memory for tpu_custom_call.1']
    #allocation4 [shape = 's32[1]{0}', space=sflag, size = 0x4, scoped, tag = 'scoped memory for tpu_custom_call.1']
    #allocation5 [shape = 'u8[8192]{0}', space=vmem, size = 0x2000, scoped, tag = 'input window, operand 1, single buffered']
    #allocation6 [shape = 's32[1]{0}', space=sflag, size = 0x4, scoped, tag = 'scoped memory for tpu_custom_call.1']
    #allocation7 [shape = 'u8[8192]{0}', space=vmem, size = 0x2000, scoped, tag = 'input window, operand 2, single buffered']
    #allocation8 [shape = 'u8[4096]{0}', space=vmem, size = 0x1000, scoped, tag = 'output window, operand 0, single buffered']
    #allocation9 [shape = 'u8[4096]{0}', space=vmem, size = 0x1000, scoped, tag = 'output window, operand 1, single buffered']
    #allocation10 [shape = 's32[1]{0}', space=sflag, size = 0x4, scoped, tag = 'scoped memory for tpu_custom_call.1']
    %10 = vsyncpa [#allocation3], 0
    %11 = vsyncpa [#allocation6], 0
    %12 = vsyncpa [#allocation4], 0
    %13 = vsyncpa [#allocation10], 0
    // Predicated region
    $region2: #{tpu_custom_call.1} parent=1 // pred_check
      _
    $region3: #{tpu_custom_call.1} parent=1 // pred_check_branch
      %15 = sbr.rel (0) target = $region5
    $region4: #{tpu_custom_call.1} parent=1 // pred_region
      %s16 = sadd.s32 0, 0
      %s17 = smul.u32 2, %s16
      %s19 = ssub.s32 256, 256
      %20 = vsyncadd [#allocation3], %s19
      %s21 = smul.addr %s17, 128
      %s22 = scalar_lea.hbm %s0, %s21
      %s23 = sshll.u32 [#allocation2], 4
      %s24 = int_to_ptr.vmem [resolvable:$true] %s23
      %29 = dma.hbm_to_vmem [thread:$0]  %s22, 256, %s24, [#allocation3], 128, 128, 8
    $region5: #{tpu_custom_call.1} parent=1 // pred_fallthru
      _
    // Predicated region
    $region6: #{tpu_custom_call.1} parent=1 // pred_check
      _
    $region7: #{tpu_custom_call.1} parent=1 // pred_check_branch
      %31 = sbr.rel (0) target = $region9
    $region8: #{tpu_custom_call.1} parent=1 // pred_region
      %s32 = sadd.s32 0, 0
      %s33 = smul.u32 2, %s32
      %s35 = ssub.s32 256, 256
      %36 = vsyncadd [#allocation6], %s35
      %s37 = smul.addr %s33, 128
      %s38 = scalar_lea.hbm %s1, %s37
      %s39 = sshll.u32 [#allocation5], 4
      %s40 = int_to_ptr.vmem [resolvable:$true] %s39
      %45 = dma.hbm_to_vmem [thread:$0]  %s38, 256, %s40, [#allocation6], 128, 128, 8
    $region9: #{tpu_custom_call.1} parent=1 // pred_fallthru
      _
    // Predicated region
    $region10: #{tpu_custom_call.1} parent=1 // pred_check
      _
    $region11: #{tpu_custom_call.1} parent=1 // pred_check_branch
      %47 = sbr.rel (0) target = $region13
    $region12: #{tpu_custom_call.1} parent=1 // pred_region
      %s48 = sadd.s32 0, 0
      %s49 = smul.u32 2, %s48
      %s51 = ssub.s32 256, 256
      %52 = vsyncadd [#allocation6], %s51
      %s53 = smul.addr %s49, 128
      %s54 = scalar_lea.hbm %s2, %s53
      %s55 = sshll.u32 [#allocation7], 4
      %s56 = int_to_ptr.vmem [resolvable:$true] %s55
      %61 = dma.hbm_to_vmem [thread:$0]  %s54, 256, %s56, [#allocation6], 128, 128, 8
    $region13: #{tpu_custom_call.1} parent=1 // pred_fallthru
      _
    // Predicated region
    $region14: #{tpu_custom_call.1} parent=1 // pred_check
      _
    $region15: #{tpu_custom_call.1} parent=1 // pred_check_branch
      %63 = sbr.rel (0) target = $region17
    $region16: #{tpu_custom_call.1} parent=1 // pred_region
      %64 = dma.done [#allocation3], 256
    $region17: #{tpu_custom_call.1} parent=1 // pred_fallthru
      _
    // Predicated region
    $region18: #{tpu_custom_call.1} parent=1 // pred_check
      _
    $region19: #{tpu_custom_call.1} parent=1 // pred_check_branch
      %66 = sbr.rel (0) target = $region21
    $region20: #{tpu_custom_call.1} parent=1 // pred_region
      %67 = dma.done [#allocation6], 256
    $region21: #{tpu_custom_call.1} parent=1 // pred_fallthru
      _
    // Predicated region
    $region22: #{tpu_custom_call.1} parent=1 // pred_check
      _
    $region23: #{tpu_custom_call.1} parent=1 // pred_check_branch
      %69 = sbr.rel (0) target = $region25
    $region24: #{tpu_custom_call.1} parent=1 // pred_region
      %70 = dma.done [#allocation6], 256
    $region25: #{tpu_custom_call.1} parent=1 // pred_fallthru
      _
    %s71 = sadd.s32 0, 0
    %s72 = smul.u32 2, %s71
    %s73 = sadd.s32 0, 0
    %s74 = smul.u32 2, %s73
    %s75 = sadd.s32 0, 0
    %s76 = smul.u32 2, %s75
    %p77 = scmp.eq.s32.totalorder 0, 0
    // Predicated region
    $region26: #{tpu_custom_call.1} parent=1 // pred_check
      %p78 = pneg %p77
    $region27: #{tpu_custom_call.1} parent=1 // pred_check_branch
      %80 = sbr.rel (%p78) target = $region29
    $region28: #{tpu_custom_call.1} parent=1 // pred_region
      %81 = vst [vmem:[#allocation8] sm:$0xff] 0.0
      %82 = vst [vmem:[#allocation9] sm:$0xff] 0.0
    $region29: #{tpu_custom_call.1} parent=1 // pred_fallthru
      _
    %v83 = vld [vmem:[#allocation2] sm:$0xff]
    %v84 = vld [vmem:[#allocation2 + $0x8] sm:$0xff]
    %v85 = vld [vmem:[#allocation5] sm:$0xff]
    %v86 = vld [vmem:[#allocation5 + $0x8] sm:$0xff]
    %v87 = vld [vmem:[#allocation7] sm:$0xff]
    %v88 = vld [vmem:[#allocation7 + $0x8] sm:$0xff]
    %v89 = vadd.f32 %v83, 1e-08
    %v90 = vadd.f32 %v84, 1e-08
    %v91 = vlog2.pop %v89
    %v92 = vmul.f32 %v91, 0.6931472
    %v93 = vlog2.pop %v90
    %v94 = vmul.f32 %v93, 0.6931472
    %v95 = vmul.f32 %v85, %v92
    %v96 = vmul.f32 %v86, %v94
    %v97 = vsub.f32 1.0, %v85
    %v98 = vsub.f32 1.0, %v86
    %v99 = vsub.f32 1.0, %v83
    %v100 = vsub.f32 1.0, %v84
    %v101 = vadd.f32 %v99, 1e-08
    %v102 = vadd.f32 %v100, 1e-08
    %v103 = vlog2.pop %v101
    %v104 = vmul.f32 %v103, 0.6931472
    %v105 = vlog2.pop %v102
    %v106 = vmul.f32 %v105, 0.6931472
    %v107 = vmul.f32 %v97, %v104
    %v108 = vmul.f32 %v98, %v106
    %v109 = vadd.f32 %v95, %v107
    %v110 = vadd.f32 %v96, %v108
    %v111 = vsub.f32 0.0, %v109
    %v112 = vsub.f32 0.0, %v110
    %v113 = vmul.f32 %v87, %v111
    %v114 = vmul.f32 %v88, %v112
    %v115 = vld [vmem:[#allocation8] sm:$0xff]
    %v116 = vadd.f32 %v113, %v114
    %v117 = vadd.f32 %v115, %v116
    %118 = vst [vmem:[#allocation8] sm:$0xff] %v117
    %v119 = vld [vmem:[#allocation9] sm:$0xff]
    %v120 = vadd.f32 %v87, %v88
    %v121 = vadd.f32 %v119, %v120
    %122 = vst [vmem:[#allocation9] sm:$0xff] %v121
    // Predicated region
    $region30: #{tpu_custom_call.1} parent=1 // pred_check
      _
    $region31: #{tpu_custom_call.1} parent=1 // pred_check_branch
      %124 = sbr.rel (0) target = $region33
    $region32: #{tpu_custom_call.1} parent=1 // pred_region
      %s126 = ssub.s32 128, 128
      %127 = vsyncadd [#allocation4], %s126
      %s129 = sshll.u32 [#allocation8], 4
      %s130 = int_to_ptr.vmem [resolvable:$true] %s129
      %132 = dma.vmem_to_hbm [thread:$0]  %s130, 128, %s3, [#allocation4]
    $region33: #{tpu_custom_call.1} parent=1 // pred_fallthru
      _
    // Predicated region
    $region34: #{tpu_custom_call.1} parent=1 // pred_check
      _
    $region35: #{tpu_custom_call.1} parent=1 // pred_check_branch
      %134 = sbr.rel (0) target = $region37
    $region36: #{tpu_custom_call.1} parent=1 // pred_region
      %s136 = ssub.s32 128, 128
      %137 = vsyncadd [#allocation10], %s136
      %s139 = sshll.u32 [#allocation9], 4
      %s140 = int_to_ptr.vmem [resolvable:$true] %s139
      %142 = dma.vmem_to_hbm [thread:$0]  %s140, 128, %s4, [#allocation10]
    $region37: #{tpu_custom_call.1} parent=1 // pred_fallthru
      _
    // Predicated region
    $region38: #{tpu_custom_call.1} parent=1 // pred_check
      _
    $region39: #{tpu_custom_call.1} parent=1 // pred_check_branch
      %144 = sbr.rel (0) target = $region41
    $region40: #{tpu_custom_call.1} parent=1 // pred_region
      %145 = dma.done [#allocation4], 128
    $region41: #{tpu_custom_call.1} parent=1 // pred_fallthru
      _
    // Predicated region
    $region42: #{tpu_custom_call.1} parent=1 // pred_check
      _
    $region43: #{tpu_custom_call.1} parent=1 // pred_check_branch
      %147 = sbr.rel (0) target = $region45
    $region44: #{tpu_custom_call.1} parent=1 // pred_region
      %148 = dma.done [#allocation10], 128
    $region45: #{tpu_custom_call.1} parent=1 // pred_fallthru
      _
    %149 = vsyncpa [#allocation3], 1
    %150 = vsyncpa [#allocation6], 1
    %151 = vsyncpa [#allocation4], 1
    %152 = vsyncpa [#allocation10], 1

</llo_original>
